<compile_context>
chip_gen: v6e
topology: v6e:2x2x1
jax: 0.10.0
libtpu: 0.0.40
codegen_flags: <defaults>
</compile_context>

<pallas_src>
import functools

import jax
import jax.numpy as jnp
from jax.experimental import pallas as pl
from jax.experimental.pallas import tpu as pltpu


def _svm_loss_kernel(x_ref, y_ref, w_ref, o_ref, *, half_gamma):
    # x_ref, y_ref: (1, B)  model scores / +-1 labels, batch on the lane axis.
    # w_ref:        (1, IN) squeezed nn.Linear(IN, 1) weight, IN on the lane axis.
    x = x_ref[...]
    y = y_ref[...]
    w = w_ref[...]

    # Hinge term: sum(clamp(1 - y*x, min=0))  -> VPU elementwise + XLU reduce.
    hinge = jnp.sum(jnp.maximum(1.0 - y * x, 0.0), keepdims=True)      # (1, 1)

    # Regularizer: W.t() @ W for the squeezed 1-D weight == dot(w, w).
    reg = jnp.sum(w * w, keepdims=True)                                # (1, 1)

    o_ref[...] = hinge + half_gamma * reg


def svm_loss(x, y, weight, gamma=0.01):
    """SVMLoss.forward.

    x:      (B,)     scores produced by the model (model(data).squeeze()).
    y:      (B,)     +-1 labels.
    weight: (1, IN)  model.linear.weight (nn.Linear(IN, 1) layout), or (IN,).
    Returns the scalar loss.
    """
    B = x.shape[0]
    x2 = x.reshape(1, B).astype(jnp.float32)          # lane-dense (1, B)
    y2 = y.reshape(1, B).astype(jnp.float32)          # lane-dense (1, B)
    w2 = weight.reshape(1, -1).astype(jnp.float32)    # .squeeze() -> (1, IN) lane-dense

    out = pl.pallas_call(
        functools.partial(_svm_loss_kernel, half_gamma=0.5 * float(gamma)),
        out_shape=jax.ShapeDtypeStruct((1, 1), jnp.float32),
        in_specs=[
            pl.BlockSpec(memory_space=pltpu.MemorySpace.VMEM),
            pl.BlockSpec(memory_space=pltpu.MemorySpace.VMEM),
            pl.BlockSpec(memory_space=pltpu.MemorySpace.VMEM),
        ],
        out_specs=pl.BlockSpec(memory_space=pltpu.MemorySpace.VMEM),
    )(x2, y2, w2)
    return out[0, 0]


if __name__ == "__main__":
    # Small deterministic example consistent with a binary linear SVM:
    # model.linear = nn.Linear(input_size, 1); x = model(data).squeeze(); y in {-1, +1}.
    batch = 8
    input_size = 32
    gamma = 0.01

    key = jax.random.PRNGKey(0)
    kx, ky, kw = jax.random.split(key, 3)

    x = jax.random.normal(kx, (batch,), dtype=jnp.float32)              # scores
    y = jnp.sign(jax.random.normal(ky, (batch,), dtype=jnp.float32))    # +-1 labels
    y = jnp.where(y == 0, 1.0, y)

    bound = 1.0 / jnp.sqrt(jnp.float32(input_size))                     # nn.Linear init scale
    weight = jax.random.uniform(kw, (1, input_size), dtype=jnp.float32,
                                minval=-bound, maxval=bound)

    loss = svm_loss(x, y, weight, gamma=gamma)
    jax.block_until_ready(loss)

    # Pure-JAX reference of SVMLoss.forward.
    w_sq = weight.squeeze()
    ref = jnp.sum(jnp.maximum(1.0 - y * x, 0.0)) + gamma * jnp.sum(w_sq * w_sq) / 2.0

    assert loss.shape == ()
    assert jnp.allclose(loss, ref, atol=1e-5, rtol=1e-5)

    print("KERNEL_OK")
</pallas_src>

<mosaic_0001>
module attributes {stable_mosaic.version = 11 : i64} {
  func.func @_svm_loss_kernel(%arg0: memref<1x8xf32, #tpu.memory_space<vmem>>, %arg1: memref<1x8xf32, #tpu.memory_space<vmem>>, %arg2: memref<1x32xf32, #tpu.memory_space<vmem>>, %arg3: memref<1x1xf32, #tpu.memory_space<vmem>>) attributes {dimension_semantics = [], scalar_prefetch = 0 : i64, scratch_operands = 0 : i64, tpu.core_type = #tpu.core_type<tc>} {
    %c0 = arith.constant 0 : index
    %c0_0 = arith.constant 0 : index
    %0 = vector.load %arg0[%c0, %c0_0] : memref<1x8xf32, #tpu.memory_space<vmem>>, vector<1x8xf32>
    %c0_1 = arith.constant 0 : index
    %c0_2 = arith.constant 0 : index
    %1 = vector.load %arg1[%c0_1, %c0_2] : memref<1x8xf32, #tpu.memory_space<vmem>>, vector<1x8xf32>
    %c0_3 = arith.constant 0 : index
    %c0_4 = arith.constant 0 : index
    %2 = vector.load %arg2[%c0_3, %c0_4] : memref<1x32xf32, #tpu.memory_space<vmem>>, vector<1x32xf32>
    %3 = arith.mulf %1, %0 : vector<1x8xf32>
    %cst = arith.constant 1.000000e+00 : f32
    %4 = vector.broadcast %cst : f32 to vector<1x8xf32>
    %5 = arith.subf %4, %3 : vector<1x8xf32>
    %cst_5 = arith.constant 0.000000e+00 : f32
    %6 = vector.broadcast %cst_5 : f32 to vector<1x8xf32>
    %7 = arith.maximumf %5, %6 : vector<1x8xf32>
    %8 = vector.shape_cast %7 : vector<1x8xf32> to vector<1x1x8xf32>
    %cst_6 = arith.constant dense<0.000000e+00> : vector<1xf32>
    %9 = vector.multi_reduction <add>, %8, %cst_6 [1, 2] : vector<1x1x8xf32> to vector<1xf32>
    %10 = vector.shape_cast %9 : vector<1xf32> to vector<1x1x1xf32>
    %11 = vector.extract %10[0, 0, 0] : f32 from vector<1x1x1xf32>
    %12 = vector.broadcast %11 : f32 to vector<1x1xf32>
    %13 = arith.mulf %2, %2 : vector<1x32xf32>
    %14 = vector.shape_cast %13 : vector<1x32xf32> to vector<1x1x32xf32>
    %cst_7 = arith.constant dense<0.000000e+00> : vector<1xf32>
    %15 = vector.multi_reduction <add>, %14, %cst_7 [1, 2] : vector<1x1x32xf32> to vector<1xf32>
    %16 = vector.shape_cast %15 : vector<1xf32> to vector<1x1x1xf32>
    %17 = vector.extract %16[0, 0, 0] : f32 from vector<1x1x1xf32>
    %18 = vector.broadcast %17 : f32 to vector<1x1xf32>
    %cst_8 = arith.constant 5.000000e-03 : f32
    %19 = vector.broadcast %cst_8 : f32 to vector<1x1xf32>
    %20 = arith.mulf %19, %18 : vector<1x1xf32>
    %21 = arith.addf %12, %20 : vector<1x1xf32>
    %c0_9 = arith.constant 0 : index
    %c0_10 = arith.constant 0 : index
    %22 = vector.load %arg3[%c0_9, %c0_10] : memref<1x1xf32, #tpu.memory_space<vmem>>, vector<1x1xf32>
    tpu.vector_store %arg3[%c0_9, %c0_10], %21 {strides = array<i32>} : memref<1x1xf32, #tpu.memory_space<vmem>>, vector<1x1xf32>,
    return
  }
}

</mosaic_0001>

<llo_original>
// kernel: tpu_custom_call.1
$region0: #{tpu_custom_call.1}
  #allocation0 [shape = 'u32[]', space=smem, size = 0x4, offset = 0x4, fixed_abs, tag = 'smem constant byte address 0x4 - core index']
  #allocation1 [shape = 'u32[144,128]{1,0:T(1,128)}', space=vmem, size = 0x12000, scoped, tag = 'internal scratch']
  %s0 = inlined_call_operand.hbm [shape: f32[1,8], index: 0, kind: input, shape index: {}]
  %s1 = inlined_call_operand.vmem [shape: f32[1,8], index: 1, kind: input, shape index: {}]
  %s2 = inlined_call_operand.vmem [shape: f32[1,32], index: 2, kind: input, shape index: {}]
  %s3 = inlined_call_operand.hbm [shape: f32[1,1], index: 3, kind: output, shape index: {}]
  %s4 = sld [smem:[#allocation0]]
  $region26: #{tpu_custom_call.1} parent=0
    _
  %s6 = ssub.s32 1, %s4
  %s7 = scalar_select 0, %s6, %s4
  $region1: #{tpu_custom_call.1} parent=0
    #allocation2 [shape = 'u8[512]{0}', space=vmem, size = 0x400, scoped, tag = 'input window, operand 0, single buffered']
    #allocation3 [shape = 's32[1]{0}', space=sflag, size = 0x4, scoped, tag = 'scoped memory for tpu_custom_call.1']
    #allocation4 [shape = 's32[1]{0}', space=sflag, size = 0x4, scoped, tag = 'scoped memory for tpu_custom_call.1']
    #allocation5 [shape = 'u8[512]{0}', space=vmem, size = 0x400, scoped, tag = 'output window, operand 0, single buffered']
    %8 = vsyncpa [#allocation3], 0
    %9 = vsyncpa [#allocation4], 0
    // Predicated region
    $region2: #{tpu_custom_call.1} parent=1 // pred_check
      _
    $region3: #{tpu_custom_call.1} parent=1 // pred_check_branch
      %11 = sbr.rel (0) target = $region5
    $region4: #{tpu_custom_call.1} parent=1 // pred_region
      %s13 = ssub.s32 16, 16
      %14 = vsyncadd [#allocation3], %s13
      %s16 = sshll.u32 [#allocation2], 4
      %s17 = int_to_ptr.vmem [resolvable:$true] %s16
      %19 = dma.hbm_to_vmem [thread:$0]  %s0, 16, %s17, [#allocation3]
    $region5: #{tpu_custom_call.1} parent=1 // pred_fallthru
      _
    // Predicated region
    $region6: #{tpu_custom_call.1} parent=1 // pred_check
      _
    $region7: #{tpu_custom_call.1} parent=1 // pred_check_branch
      %21 = sbr.rel (0) target = $region9
    $region8: #{tpu_custom_call.1} parent=1 // pred_region
      _
    $region9: #{tpu_custom_call.1} parent=1 // pred_fallthru
      _
    // Predicated region
    $region10: #{tpu_custom_call.1} parent=1 // pred_check
      _
    $region11: #{tpu_custom_call.1} parent=1 // pred_check_branch
      %23 = sbr.rel (0) target = $region13
    $region12: #{tpu_custom_call.1} parent=1 // pred_region
      _
    $region13: #{tpu_custom_call.1} parent=1 // pred_fallthru
      _
    // Predicated region
    $region14: #{tpu_custom_call.1} parent=1 // pred_check
      _
    $region15: #{tpu_custom_call.1} parent=1 // pred_check_branch
      %25 = sbr.rel (0) target = $region17
    $region16: #{tpu_custom_call.1} parent=1 // pred_region
      %26 = dma.done [#allocation3], 16
    $region17: #{tpu_custom_call.1} parent=1 // pred_fallthru
      _
    %v27 = vld [vmem:[#allocation2] sm:$0x1]
    %v28 = vld [vmem:[%s1] sm:$0x1]
    %v29 = vld [vmem:[%s2] sm:$0x1]
    %v30 = vmul.f32 %v28, %v27
    %v31 = vsub.f32 1.0, %v30
    %v32 = vmax.f32 %v31, 0.0
    %vm33 = vcmask 57344
    %v34 = vsel %vm33, %v32, 0.0
    %35 = vadd.xlane.f32.xlu0 %v34
    %v36 = vpop.xlane.xlu0 %35
    %v37 = vrot.slane %v36, 4
    %v38 = vadd.f32 %v36, %v37
    %v39 = vrot.slane %v38, 2
    %v40 = vadd.f32 %v38, %v39
    %v41 = vrot.slane %v40, 1
    %v42 = vadd.f32 %v40, %v41
    %s43 = vtos %v42
    %v44 = vstv %s43
    %v45 = vmul.f32 %v29, %v29
    %vm46 = vcmask 253952
    %v47 = vsel %vm46, %v45, 0.0
    %48 = vadd.xlane.f32.xlu0 %v47
    %v49 = vpop.xlane.xlu0 %48
    %v50 = vrot.slane %v49, 4
    %v51 = vadd.f32 %v49, %v50
    %v52 = vrot.slane %v51, 2
    %v53 = vadd.f32 %v51, %v52
    %v54 = vrot.slane %v53, 1
    %v55 = vadd.f32 %v53, %v54
    %s56 = vtos %v55
    %v57 = vstv %s56
    %v58 = vmul.f32 %v57, 0.005
    %v59 = vadd.f32 %v44, %v58
    %vm60 = vcmask 0
    %61 = vst.msk [vmem:[#allocation5] sm:$0x1] %vm60, %v59
    // Predicated region
    $region18: #{tpu_custom_call.1} parent=1 // pred_check
      _
    $region19: #{tpu_custom_call.1} parent=1 // pred_check_branch
      %63 = sbr.rel (0) target = $region21
    $region20: #{tpu_custom_call.1} parent=1 // pred_region
      %s65 = ssub.s32 16, 16
      %66 = vsyncadd [#allocation4], %s65
      %s68 = sshll.u32 [#allocation5], 4
      %s69 = int_to_ptr.vmem [resolvable:$true] %s68
      %71 = dma.vmem_to_hbm [thread:$0]  %s69, 16, %s3, [#allocation4]
    $region21: #{tpu_custom_call.1} parent=1 // pred_fallthru
      _
    // Predicated region
    $region22: #{tpu_custom_call.1} parent=1 // pred_check
      _
    $region23: #{tpu_custom_call.1} parent=1 // pred_check_branch
      %73 = sbr.rel (0) target = $region25
    $region24: #{tpu_custom_call.1} parent=1 // pred_region
      %74 = dma.done [#allocation4], 16
    $region25: #{tpu_custom_call.1} parent=1 // pred_fallthru
      _
    %75 = vsyncpa [#allocation3], 1
    %76 = vsyncpa [#allocation4], 1

</llo_original>
